<compile_context>
chip_gen: v5e
topology: v5e:2x2
jax: 0.10.0
libtpu: 0.0.40
codegen_flags: <defaults>
</compile_context>

<pallas_src>
import functools

import jax
import jax.numpy as jnp
from jax.experimental import pallas as pl
from jax.experimental.pallas import tpu as pltpu


def _simclr_kernel(zi_row_ref, zj_row_ref, zi_col_ref, zj_col_ref, out_ref,
                   denom_i_ref, denom_j_ref, *, temperature, eps, mxu_dtype):
    j = pl.program_id(1)
    n_col = pl.num_programs(1)
    inv_t = jnp.float32(1.0 / temperature)

    @pl.when(j == 0)
    def _init():
        denom_i_ref[...] = jnp.zeros_like(denom_i_ref)
        denom_j_ref[...] = jnp.zeros_like(denom_j_ref)

    def _normalize(z):
        z = z.astype(jnp.float32)
        sq = jnp.sum(z * z, axis=-1, keepdims=True)
        # Per-row clamp: z / max(|z|, eps). Matches the reference product-clamp for any
        # non-degenerate row (norms >> eps).
        return z * jax.lax.rsqrt(jnp.maximum(sq, jnp.float32(eps * eps)))

    zi_r = _normalize(zi_row_ref[...])      # (tm, D)
    zj_r = _normalize(zj_row_ref[...])      # (tm, D)
    zi_c = _normalize(zi_col_ref[...])      # (tn, D)
    zj_c = _normalize(zj_col_ref[...])      # (tn, D)

    contract = (((1,), (1,)), ((), ()))     # contract last dims -> no transpose needed

    def _exp_rowsum(rows, cols):
        if mxu_dtype is not None:
            rows = rows.astype(mxu_dtype)
            cols = cols.astype(mxu_dtype)
        sim = jax.lax.dot_general(rows, cols, contract,
                                  preferred_element_type=jnp.float32)  # (tm, tn) on MXU
        return jnp.sum(jnp.exp(sim * inv_t), axis=1, keepdims=True)    # (tm, 1)

    # Accumulate the softmax denominators over this column block for both halves of z.
    denom_i_ref[...] += _exp_rowsum(zi_r, zi_c) + _exp_rowsum(zi_r, zj_c)
    denom_j_ref[...] += _exp_rowsum(zj_r, zi_c) + _exp_rowsum(zj_r, zj_c)

    @pl.when(j == n_col - 1)
    def _finalize():
        # Positive pair logit: cos(z_i[r], z_j[r]) / T  (same for both halves).
        pos = jnp.sum(zi_r * zj_r, axis=-1, keepdims=True) * inv_t        # (tm, 1)
        # Remove the self-similarity term from each denominator (== exp(1/T) for
        # non-degenerate rows; computed exactly so zero rows stay consistent).
        self_i = jnp.exp(jnp.sum(zi_r * zi_r, axis=-1, keepdims=True) * inv_t)
        self_j = jnp.exp(jnp.sum(zj_r * zj_r, axis=-1, keepdims=True) * inv_t)
        loss_i = -pos + jnp.log(denom_i_ref[...] - self_i)                # rows of z_i
        loss_j = -pos + jnp.log(denom_j_ref[...] - self_j)                # rows of z_j
        out_ref[...] = loss_i + loss_j                                    # (tm, 1)


def _pick_tile(b, d):
    # Largest MXU-friendly tile that divides B and keeps the (tile, D) slabs small.
    budget_rows = max(8, (8 * 1024 * 1024) // max(1, 4 * d))   # ~8 MiB of f32 per operand set
    for t in (512, 256, 128, 64, 32, 16, 8):
        if b % t == 0 and t <= budget_rows:
            return t
    return b


def simclr_loss(z_i, z_j, temperature: float = 0.2, eps: float = 1e-8,
                use_bf16_matmul: bool = False):
    assert z_i.shape == z_j.shape and z_i.ndim == 2
    b, d = z_i.shape
    tm = _pick_tile(b, d)
    tn = _pick_tile(b, d)
    assert b % tm == 0 and b % tn == 0

    kernel = functools.partial(
        _simclr_kernel,
        temperature=float(temperature),
        eps=float(eps),
        mxu_dtype=jnp.bfloat16 if use_bf16_matmul else None,
    )

    per_row = pl.pallas_call(
        kernel,
        out_shape=jax.ShapeDtypeStruct((b, 1), jnp.float32),
        grid_spec=pltpu.PrefetchScalarGridSpec(
            num_scalar_prefetch=0,
            grid=(b // tm, b // tn),
            in_specs=[
                pl.BlockSpec((tm, d), lambda i, j: (i, 0)),   # z_i row tile
                pl.BlockSpec((tm, d), lambda i, j: (i, 0)),   # z_j row tile
                pl.BlockSpec((tn, d), lambda i, j: (j, 0)),   # z_i col tile
                pl.BlockSpec((tn, d), lambda i, j: (j, 0)),   # z_j col tile
            ],
            out_specs=pl.BlockSpec((tm, 1), lambda i, j: (i, 0)),
            scratch_shapes=[
                pltpu.VMEM((tm, 1), jnp.float32),   # denom accumulator, z_i-half rows
                pltpu.VMEM((tm, 1), jnp.float32),   # denom accumulator, z_j-half rows
            ],
        ),
        compiler_params=pltpu.CompilerParams(
            dimension_semantics=("parallel", "arbitrary"),
            vmem_limit_bytes=32 * 1024 * 1024,
        ),
    )(z_i, z_j, z_i, z_j)

    # Tiny final reduction over (B, 1) per-row losses (sum of both halves per row).
    return jnp.sum(per_row) / jnp.float32(2 * b)


def _reference_loss(z_i, z_j, temperature=0.2, eps=1e-8):
    # Pure-JAX reference mirroring the PyTorch SimCLR semantics.
    b = z_i.shape[0]
    z = jnp.concatenate([z_i, z_j], axis=0).astype(jnp.float32)
    norm = jnp.sqrt(jnp.sum(z * z, axis=-1, keepdims=True))
    sim = (z @ z.T) / jnp.maximum(norm * norm.T, eps)
    n = 2 * b
    idx = jnp.arange(n)
    pos_col = jnp.where(idx < b, idx + b, idx - b)
    positives = sim[idx, pos_col]
    mask = 1.0 - jnp.eye(n, dtype=jnp.float32)
    numerator = jnp.exp(positives / temperature)
    denominator = jnp.sum(mask * jnp.exp(sim / temperature), axis=1)
    all_losses = -jnp.log(numerator / denominator)
    return jnp.sum(all_losses) / n


if __name__ == "__main__":
    key = jax.random.PRNGKey(0)
    k1, k2 = jax.random.split(key)
    B, D = 8, 32                      # small synthetic shapes consistent with forward()
    z_i = jax.random.normal(k1, (B, D), dtype=jnp.float32)
    z_j = jax.random.normal(k2, (B, D), dtype=jnp.float32)

    loss = simclr_loss(z_i, z_j, temperature=0.2)
    loss = jax.block_until_ready(loss)

    ref = _reference_loss(z_i, z_j, temperature=0.2)
    assert jnp.allclose(loss, ref, atol=1e-4, rtol=1e-4), (loss, ref)
    print("KERNEL_OK")
</pallas_src>

<mosaic_0001>
module attributes {stable_mosaic.version = 11 : i64} {
  func.func @_simclr_kernel(%arg0: i32, %arg1: i32, %arg2: memref<8x32xf32, #tpu.memory_space<vmem>>, %arg3: memref<8x32xf32, #tpu.memory_space<vmem>>, %arg4: memref<8x32xf32, #tpu.memory_space<vmem>>, %arg5: memref<8x32xf32, #tpu.memory_space<vmem>>, %arg6: memref<8x1xf32, #tpu.memory_space<vmem>>, %arg7: memref<8x1xf32, #tpu.memory_space<vmem>>, %arg8: memref<8x1xf32, #tpu.memory_space<vmem>>) attributes {dimension_semantics = [#tpu.dimension_semantics<parallel>, #tpu.dimension_semantics<arbitrary>], iteration_bounds = array<i64: 1, 1>, scalar_prefetch = 0 : i64, scratch_operands = 2 : i64, tpu.core_type = #tpu.core_type<tc>, window_params = [{transform_indices = @transform_0, window_bounds = array<i64: 8, 32>}, {transform_indices = @transform_1, window_bounds = array<i64: 8, 32>}, {transform_indices = @transform_2, window_bounds = array<i64: 8, 32>}, {transform_indices = @transform_3, window_bounds = array<i64: 8, 32>}, {transform_indices = @transform_4, window_bounds = array<i64: 8, 1>}]} {
    %c0_i32 = arith.constant 0 : i32
    %0 = arith.cmpi eq, %arg1, %c0_i32 : i32
    %1 = arith.extui %0 : i1 to i32
    %c0_i32_0 = arith.constant 0 : i32
    %2 = arith.cmpi ne, %1, %c0_i32_0 : i32
    scf.if %2 {
      %cst_38 = arith.constant 0.000000e+00 : f32
      %74 = vector.broadcast %cst_38 : f32 to vector<8x1xf32>
      %c0_39 = arith.constant 0 : index
      %c0_40 = arith.constant 0 : index
      %75 = vector.load %arg7[%c0_39, %c0_40] : memref<8x1xf32, #tpu.memory_space<vmem>>, vector<8x1xf32>
      tpu.vector_store %arg7[%c0_39, %c0_40], %74 {strides = array<i32>} : memref<8x1xf32, #tpu.memory_space<vmem>>, vector<8x1xf32>,
      %cst_41 = arith.constant 0.000000e+00 : f32
      %76 = vector.broadcast %cst_41 : f32 to vector<8x1xf32>
      %c0_42 = arith.constant 0 : index
      %c0_43 = arith.constant 0 : index
      %77 = vector.load %arg8[%c0_42, %c0_43] : memref<8x1xf32, #tpu.memory_space<vmem>>, vector<8x1xf32>
      tpu.vector_store %arg8[%c0_42, %c0_43], %76 {strides = array<i32>} : memref<8x1xf32, #tpu.memory_space<vmem>>, vector<8x1xf32>,
    } else {
    }
    %c0 = arith.constant 0 : index
    %c0_1 = arith.constant 0 : index
    %3 = vector.load %arg2[%c0, %c0_1] : memref<8x32xf32, #tpu.memory_space<vmem>>, vector<8x32xf32>
    %4 = arith.mulf %3, %3 : vector<8x32xf32>
    %cst = arith.constant dense<0.000000e+00> : vector<8xf32>
    %5 = vector.multi_reduction <add>, %4, %cst [1] : vector<8x32xf32> to vector<8xf32>
    %6 = vector.shape_cast %5 : vector<8xf32> to vector<8x1xf32>
    %cst_2 = arith.constant 1.000000e-16 : f32
    %7 = vector.broadcast %cst_2 : f32 to vector<8x1xf32>
    %8 = arith.maximumf %6, %7 : vector<8x1xf32>
    %9 = math.rsqrt %8 : vector<8x1xf32>
    %10 = vector.broadcast %9 : vector<8x1xf32> to vector<8x32xf32>
    %11 = arith.mulf %3, %10 : vector<8x32xf32>
    %c0_3 = arith.constant 0 : index
    %c0_4 = arith.constant 0 : index
    %12 = vector.load %arg3[%c0_3, %c0_4] : memref<8x32xf32, #tpu.memory_space<vmem>>, vector<8x32xf32>
    %13 = arith.mulf %12, %12 : vector<8x32xf32>
    %cst_5 = arith.constant dense<0.000000e+00> : vector<8xf32>
    %14 = vector.multi_reduction <add>, %13, %cst_5 [1] : vector<8x32xf32> to vector<8xf32>
    %15 = vector.shape_cast %14 : vector<8xf32> to vector<8x1xf32>
    %cst_6 = arith.constant 1.000000e-16 : f32
    %16 = vector.broadcast %cst_6 : f32 to vector<8x1xf32>
    %17 = arith.maximumf %15, %16 : vector<8x1xf32>
    %18 = math.rsqrt %17 : vector<8x1xf32>
    %19 = vector.broadcast %18 : vector<8x1xf32> to vector<8x32xf32>
    %20 = arith.mulf %12, %19 : vector<8x32xf32>
    %c0_7 = arith.constant 0 : index
    %c0_8 = arith.constant 0 : index
    %21 = vector.load %arg4[%c0_7, %c0_8] : memref<8x32xf32, #tpu.memory_space<vmem>>, vector<8x32xf32>
    %22 = arith.mulf %21, %21 : vector<8x32xf32>
    %cst_9 = arith.constant dense<0.000000e+00> : vector<8xf32>
    %23 = vector.multi_reduction <add>, %22, %cst_9 [1] : vector<8x32xf32> to vector<8xf32>
    %24 = vector.shape_cast %23 : vector<8xf32> to vector<8x1xf32>
    %cst_10 = arith.constant 1.000000e-16 : f32
    %25 = vector.broadcast %cst_10 : f32 to vector<8x1xf32>
    %26 = arith.maximumf %24, %25 : vector<8x1xf32>
    %27 = math.rsqrt %26 : vector<8x1xf32>
    %28 = vector.broadcast %27 : vector<8x1xf32> to vector<8x32xf32>
    %29 = arith.mulf %21, %28 : vector<8x32xf32>
    %c0_11 = arith.constant 0 : index
    %c0_12 = arith.constant 0 : index
    %30 = vector.load %arg5[%c0_11, %c0_12] : memref<8x32xf32, #tpu.memory_space<vmem>>, vector<8x32xf32>
    %31 = arith.mulf %30, %30 : vector<8x32xf32>
    %cst_13 = arith.constant dense<0.000000e+00> : vector<8xf32>
    %32 = vector.multi_reduction <add>, %31, %cst_13 [1] : vector<8x32xf32> to vector<8xf32>
    %33 = vector.shape_cast %32 : vector<8xf32> to vector<8x1xf32>
    %cst_14 = arith.constant 1.000000e-16 : f32
    %34 = vector.broadcast %cst_14 : f32 to vector<8x1xf32>
    %35 = arith.maximumf %33, %34 : vector<8x1xf32>
    %36 = math.rsqrt %35 : vector<8x1xf32>
    %37 = vector.broadcast %36 : vector<8x1xf32> to vector<8x32xf32>
    %38 = arith.mulf %30, %37 : vector<8x32xf32>
    %c0_15 = arith.constant 0 : index
    %c0_16 = arith.constant 0 : index
    %39 = vector.load %arg7[%c0_15, %c0_16] : memref<8x1xf32, #tpu.memory_space<vmem>>, vector<8x1xf32>
    %cst_17 = arith.constant dense<0.000000e+00> : vector<8x8xf32>
    %40 = tpu.matmul %11, %29, %cst_17 {dimension_numbers = #tpu.dot_dimension_numbers<[1], [1], [0], [0], [0, 0, 1, 0], [], []>} : vector<8x32xf32>, vector<8x32xf32>, vector<8x8xf32> -> vector<8x8xf32>
    %cst_18 = arith.constant 5.000000e+00 : f32
    %41 = vector.broadcast %cst_18 : f32 to vector<8x8xf32>
    %42 = arith.mulf %40, %41 : vector<8x8xf32>
    %43 = math.exp %42 : vector<8x8xf32>
    %cst_19 = arith.constant dense<0.000000e+00> : vector<8xf32>
    %44 = vector.multi_reduction <add>, %43, %cst_19 [1] : vector<8x8xf32> to vector<8xf32>
    %45 = vector.shape_cast %44 : vector<8xf32> to vector<8x1xf32>
    %cst_20 = arith.constant dense<0.000000e+00> : vector<8x8xf32>
    %46 = tpu.matmul %11, %38, %cst_20 {dimension_numbers = #tpu.dot_dimension_numbers<[1], [1], [0], [0], [0, 0, 1, 0], [], []>} : vector<8x32xf32>, vector<8x32xf32>, vector<8x8xf32> -> vector<8x8xf32>
    %cst_21 = arith.constant 5.000000e+00 : f32
    %47 = vector.broadcast %cst_21 : f32 to vector<8x8xf32>
    %48 = arith.mulf %46, %47 : vector<8x8xf32>
    %49 = math.exp %48 : vector<8x8xf32>
    %cst_22 = arith.constant dense<0.000000e+00> : vector<8xf32>
    %50 = vector.multi_reduction <add>, %49, %cst_22 [1] : vector<8x8xf32> to vector<8xf32>
    %51 = vector.shape_cast %50 : vector<8xf32> to vector<8x1xf32>
    %52 = arith.addf %45, %51 : vector<8x1xf32>
    %53 = arith.addf %39, %52 : vector<8x1xf32>
    %c0_23 = arith.constant 0 : index
    %c0_24 = arith.constant 0 : index
    %54 = vector.load %arg7[%c0_23, %c0_24] : memref<8x1xf32, #tpu.memory_space<vmem>>, vector<8x1xf32>
    tpu.vector_store %arg7[%c0_23, %c0_24], %53 {strides = array<i32>} : memref<8x1xf32, #tpu.memory_space<vmem>>, vector<8x1xf32>,
    %c0_25 = arith.constant 0 : index
    %c0_26 = arith.constant 0 : index
    %55 = vector.load %arg8[%c0_25, %c0_26] : memref<8x1xf32, #tpu.memory_space<vmem>>, vector<8x1xf32>
    %cst_27 = arith.constant dense<0.000000e+00> : vector<8x8xf32>
    %56 = tpu.matmul %20, %29, %cst_27 {dimension_numbers = #tpu.dot_dimension_numbers<[1], [1], [0], [0], [0, 0, 1, 0], [], []>} : vector<8x32xf32>, vector<8x32xf32>, vector<8x8xf32> -> vector<8x8xf32>
    %cst_28 = arith.constant 5.000000e+00 : f32
    %57 = vector.broadcast %cst_28 : f32 to vector<8x8xf32>
    %58 = arith.mulf %56, %57 : vector<8x8xf32>
    %59 = math.exp %58 : vector<8x8xf32>
    %cst_29 = arith.constant dense<0.000000e+00> : vector<8xf32>
    %60 = vector.multi_reduction <add>, %59, %cst_29 [1] : vector<8x8xf32> to vector<8xf32>
    %61 = vector.shape_cast %60 : vector<8xf32> to vector<8x1xf32>
    %cst_30 = arith.constant dense<0.000000e+00> : vector<8x8xf32>
    %62 = tpu.matmul %20, %38, %cst_30 {dimension_numbers = #tpu.dot_dimension_numbers<[1], [1], [0], [0], [0, 0, 1, 0], [], []>} : vector<8x32xf32>, vector<8x32xf32>, vector<8x8xf32> -> vector<8x8xf32>
    %cst_31 = arith.constant 5.000000e+00 : f32
    %63 = vector.broadcast %cst_31 : f32 to vector<8x8xf32>
    %64 = arith.mulf %62, %63 : vector<8x8xf32>
    %65 = math.exp %64 : vector<8x8xf32>
    %cst_32 = arith.constant dense<0.000000e+00> : vector<8xf32>
    %66 = vector.multi_reduction <add>, %65, %cst_32 [1] : vector<8x8xf32> to vector<8xf32>
    %67 = vector.shape_cast %66 : vector<8xf32> to vector<8x1xf32>
    %68 = arith.addf %61, %67 : vector<8x1xf32>
    %69 = arith.addf %55, %68 : vector<8x1xf32>
    %c0_33 = arith.constant 0 : index
    %c0_34 = arith.constant 0 : index
    %70 = vector.load %arg8[%c0_33, %c0_34] : memref<8x1xf32, #tpu.memory_space<vmem>>, vector<8x1xf32>
    tpu.vector_store %arg8[%c0_33, %c0_34], %69 {strides = array<i32>} : memref<8x1xf32, #tpu.memory_space<vmem>>, vector<8x1xf32>,
    %c0_i32_35 = arith.constant 0 : i32
    %71 = arith.cmpi eq, %arg1, %c0_i32_35 : i32
    %72 = arith.extui %71 : i1 to i32
    %cst_36 = arith.constant 5.000000e+00 : f32
    %c0_i32_37 = arith.constant 0 : i32
    %73 = arith.cmpi ne, %72, %c0_i32_37 : i32
    scf.if %73 {
      %74 = arith.mulf %11, %20 : vector<8x32xf32>
      %cst_38 = arith.constant dense<0.000000e+00> : vector<8xf32>
      %75 = vector.multi_reduction <add>, %74, %cst_38 [1] : vector<8x32xf32> to vector<8xf32>
      %76 = vector.shape_cast %75 : vector<8xf32> to vector<8x1xf32>
      %77 = vector.broadcast %cst_36 : f32 to vector<8x1xf32>
      %78 = arith.mulf %76, %77 : vector<8x1xf32>
      %79 = arith.mulf %11, %11 : vector<8x32xf32>
      %cst_39 = arith.constant dense<0.000000e+00> : vector<8xf32>
      %80 = vector.multi_reduction <add>, %79, %cst_39 [1] : vector<8x32xf32> to vector<8xf32>
      %81 = vector.shape_cast %80 : vector<8xf32> to vector<8x1xf32>
      %82 = vector.broadcast %cst_36 : f32 to vector<8x1xf32>
      %83 = arith.mulf %81, %82 : vector<8x1xf32>
      %84 = math.exp %83 : vector<8x1xf32>
      %85 = arith.mulf %20, %20 : vector<8x32xf32>
      %cst_40 = arith.constant dense<0.000000e+00> : vector<8xf32>
      %86 = vector.multi_reduction <add>, %85, %cst_40 [1] : vector<8x32xf32> to vector<8xf32>
      %87 = vector.shape_cast %86 : vector<8xf32> to vector<8x1xf32>
      %88 = vector.broadcast %cst_36 : f32 to vector<8x1xf32>
      %89 = arith.mulf %87, %88 : vector<8x1xf32>
      %90 = math.exp %89 : vector<8x1xf32>
      %cst_41 = arith.constant 0.000000e+00 : f32
      %91 = vector.broadcast %cst_41 : f32 to vector<8x1xf32>
      %92 = arith.subf %91, %78 : vector<8x1xf32>
      %c0_42 = arith.constant 0 : index
      %c0_43 = arith.constant 0 : index
      %93 = vector.load %arg7[%c0_42, %c0_43] : memref<8x1xf32, #tpu.memory_space<vmem>>, vector<8x1xf32>
      %94 = arith.subf %93, %84 : vector<8x1xf32>
      %95 = math.log %94 : vector<8x1xf32>
      %96 = arith.addf %92, %95 : vector<8x1xf32>
      %cst_44 = arith.constant 0.000000e+00 : f32
      %97 = vector.broadcast %cst_44 : f32 to vector<8x1xf32>
      %98 = arith.subf %97, %78 : vector<8x1xf32>
      %c0_45 = arith.constant 0 : index
      %c0_46 = arith.constant 0 : index
      %99 = vector.load %arg8[%c0_45, %c0_46] : memref<8x1xf32, #tpu.memory_space<vmem>>, vector<8x1xf32>
      %100 = arith.subf %99, %90 : vector<8x1xf32>
      %101 = math.log %100 : vector<8x1xf32>
      %102 = arith.addf %98, %101 : vector<8x1xf32>
      %103 = arith.addf %96, %102 : vector<8x1xf32>
      %c0_47 = arith.constant 0 : index
      %c0_48 = arith.constant 0 : index
      %104 = vector.load %arg6[%c0_47, %c0_48] : memref<8x1xf32, #tpu.memory_space<vmem>>, vector<8x1xf32>
      tpu.vector_store %arg6[%c0_47, %c0_48], %103 {strides = array<i32>} : memref<8x1xf32, #tpu.memory_space<vmem>>, vector<8x1xf32>,
    } else {
    }
    return
  }
  func.func @transform_0(%arg0: i32, %arg1: i32) -> (i32, i32) {
    %c0_i32 = arith.constant 0 : i32
    %c0_i32_0 = arith.constant 0 : i32
    return %arg0, %c0_i32 : i32, i32
  }
  func.func @transform_1(%arg0: i32, %arg1: i32) -> (i32, i32) {
    %c0_i32 = arith.constant 0 : i32
    %c0_i32_0 = arith.constant 0 : i32
    return %arg0, %c0_i32 : i32, i32
  }
  func.func @transform_2(%arg0: i32, %arg1: i32) -> (i32, i32) {
    %c0_i32 = arith.constant 0 : i32
    %c0_i32_0 = arith.constant 0 : i32
    return %arg1, %c0_i32 : i32, i32
  }
  func.func @transform_3(%arg0: i32, %arg1: i32) -> (i32, i32) {
    %c0_i32 = arith.constant 0 : i32
    %c0_i32_0 = arith.constant 0 : i32
    return %arg1, %c0_i32 : i32, i32
  }
  func.func @transform_4(%arg0: i32, %arg1: i32) -> (i32, i32) {
    %c0_i32 = arith.constant 0 : i32
    %c0_i32_0 = arith.constant 0 : i32
    return %arg0, %c0_i32 : i32, i32
  }
}

</mosaic_0001>

<llo_original>
// kernel: tpu_custom_call.1
$region0: #{tpu_custom_call.1}
  #allocation0 [shape = 'u32[]', space=smem, size = 0x4, offset = 0x4, fixed_abs, tag = 'smem constant byte address 0x4 - core index']
  #allocation1 [shape = 'u32[72,128]{1,0:T(1,128)}', space=vmem, size = 0x9000, scoped, tag = 'internal scratch']
  #allocation2 [shape = 'f32[8,1]{1,0:T(8,128)}', space=vmem, size = 0x1000, scoped, tag = 'scratch operand']
  #allocation3 [shape = 'f32[8,1]{1,0:T(8,128)}', space=vmem, size = 0x1000, scoped, tag = 'scratch operand']
  %s0 = inlined_call_operand.hbm [shape: f32[8,32], index: 0, kind: input, shape index: {}]
  %s1 = inlined_call_operand.hbm [shape: f32[8,32], index: 1, kind: input, shape index: {}]
  %s2 = inlined_call_operand.hbm [shape: f32[8,32], index: 2, kind: input, shape index: {}]
  %s3 = inlined_call_operand.hbm [shape: f32[8,32], index: 3, kind: input, shape index: {}]
  %s4 = inlined_call_operand.vmem [shape: f32[8,1], index: 4, kind: output, shape index: {}]
  %s5 = sld [smem:[#allocation0]]
  $region50: #{tpu_custom_call.1} parent=0
    _
  %s7 = ssub.s32 1, %s5
  %s8 = scalar_select 0, %s7, %s5
  $region1: #{tpu_custom_call.1} parent=0
    #allocation4 [shape = 'u8[4096]{0}', space=vmem, size = 0x1000, scoped, tag = 'input window, operand 0, single buffered']
    #allocation5 [shape = 's32[1]{0}', space=sflag, size = 0x4, scoped, tag = 'scoped memory for tpu_custom_call.1']
    #allocation6 [shape = 'u8[4096]{0}', space=vmem, size = 0x1000, scoped, tag = 'input window, operand 1, single buffered']
    #allocation7 [shape = 's32[1]{0}', space=sflag, size = 0x4, scoped, tag = 'scoped memory for tpu_custom_call.1']
    #allocation8 [shape = 'u8[4096]{0}', space=vmem, size = 0x1000, scoped, tag = 'input window, operand 2, single buffered']
    #allocation9 [shape = 'u8[4096]{0}', space=vmem, size = 0x1000, scoped, tag = 'input window, operand 3, single buffered']
    #allocation10 [shape = 's32[1]{0}', space=sflag, size = 0x4, scoped, tag = 'scoped memory for tpu_custom_call.1']
    %9 = vsyncpa [#allocation5], 0
    %10 = vsyncpa [#allocation7], 0
    %11 = vsyncpa [#allocation10], 0
    // Predicated region
    $region2: #{tpu_custom_call.1} parent=1 // pred_check
      _
    $region3: #{tpu_custom_call.1} parent=1 // pred_check_branch
      %13 = sbr.rel (0) target = $region5
    $region4: #{tpu_custom_call.1} parent=1 // pred_region
      %15 = vsyncadd [#allocation5], 0
      %s17 = sshll.u32 %s0, 4
      %s18 = int_to_ptr.hbm [resolvable:$true] %s17
      %s19 = sshll.u32 [#allocation4], 4
      %s20 = int_to_ptr.vmem [resolvable:$true] %s19
      %22 = dma.hbm_to_vmem [thread:$0]  %s18, 128, %s20, [#allocation5]
    $region5: #{tpu_custom_call.1} parent=1 // pred_fallthru
      _
    // Predicated region
    $region6: #{tpu_custom_call.1} parent=1 // pred_check
      _
    $region7: #{tpu_custom_call.1} parent=1 // pred_check_branch
      %24 = sbr.rel (0) target = $region9
    $region8: #{tpu_custom_call.1} parent=1 // pred_region
      %26 = vsyncadd [#allocation7], 0
      %s28 = sshll.u32 %s1, 4
      %s29 = int_to_ptr.hbm [resolvable:$true] %s28
      %s30 = sshll.u32 [#allocation6], 4
      %s31 = int_to_ptr.vmem [resolvable:$true] %s30
      %33 = dma.hbm_to_vmem [thread:$0]  %s29, 128, %s31, [#allocation7]
    $region9: #{tpu_custom_call.1} parent=1 // pred_fallthru
      _
    // Predicated region
    $region10: #{tpu_custom_call.1} parent=1 // pred_check
      _
    $region11: #{tpu_custom_call.1} parent=1 // pred_check_branch
      %35 = sbr.rel (0) target = $region13
    $region12: #{tpu_custom_call.1} parent=1 // pred_region
      %37 = vsyncadd [#allocation7], 0
      %s39 = sshll.u32 %s2, 4
      %s40 = int_to_ptr.hbm [resolvable:$true] %s39
      %s41 = sshll.u32 [#allocation8], 4
      %s42 = int_to_ptr.vmem [resolvable:$true] %s41
      %44 = dma.hbm_to_vmem [thread:$0]  %s40, 128, %s42, [#allocation7]
    $region13: #{tpu_custom_call.1} parent=1 // pred_fallthru
      _
    // Predicated region
    $region14: #{tpu_custom_call.1} parent=1 // pred_check
      _
    $region15: #{tpu_custom_call.1} parent=1 // pred_check_branch
      %46 = sbr.rel (0) target = $region17
    $region16: #{tpu_custom_call.1} parent=1 // pred_region
      %48 = vsyncadd [#allocation10], 0
      %s50 = sshll.u32 %s3, 4
      %s51 = int_to_ptr.hbm [resolvable:$true] %s50
      %s52 = sshll.u32 [#allocation9], 4
      %s53 = int_to_ptr.vmem [resolvable:$true] %s52
      %55 = dma.hbm_to_vmem [thread:$0]  %s51, 128, %s53, [#allocation10]
    $region17: #{tpu_custom_call.1} parent=1 // pred_fallthru
      _
    // Predicated region
    $region18: #{tpu_custom_call.1} parent=1 // pred_check
      _
    $region19: #{tpu_custom_call.1} parent=1 // pred_check_branch
      %57 = sbr.rel (0) target = $region21
    $region20: #{tpu_custom_call.1} parent=1 // pred_region
      %59 = dma.done [#allocation5], 128
    $region21: #{tpu_custom_call.1} parent=1 // pred_fallthru
      _
    // Predicated region
    $region22: #{tpu_custom_call.1} parent=1 // pred_check
      _
    $region23: #{tpu_custom_call.1} parent=1 // pred_check_branch
      %61 = sbr.rel (0) target = $region25
    $region24: #{tpu_custom_call.1} parent=1 // pred_region
      %63 = dma.done [#allocation7], 128
    $region25: #{tpu_custom_call.1} parent=1 // pred_fallthru
      _
    // Predicated region
    $region26: #{tpu_custom_call.1} parent=1 // pred_check
      _
    $region27: #{tpu_custom_call.1} parent=1 // pred_check_branch
      %65 = sbr.rel (0) target = $region29
    $region28: #{tpu_custom_call.1} parent=1 // pred_region
      %67 = dma.done [#allocation7], 128
    $region29: #{tpu_custom_call.1} parent=1 // pred_fallthru
      _
    // Predicated region
    $region30: #{tpu_custom_call.1} parent=1 // pred_check
      _
    $region31: #{tpu_custom_call.1} parent=1 // pred_check_branch
      %69 = sbr.rel (0) target = $region33
    $region32: #{tpu_custom_call.1} parent=1 // pred_region
      %71 = dma.done [#allocation10], 128
    $region33: #{tpu_custom_call.1} parent=1 // pred_fallthru
      _
    %p72 = scmp.eq.s32.totalorder 0, 0
    // Predicated region
    $region34: #{tpu_custom_call.1} parent=1 // pred_check
      %p73 = pneg %p72
    $region35: #{tpu_custom_call.1} parent=1 // pred_check_branch
      %75 = sbr.rel (%p73) target = $region37
    $region36: #{tpu_custom_call.1} parent=1 // pred_region
      %vm76 = vcmask 7168
      %77 = vst.msk [vmem:[#allocation2] sm:$0xff] %vm76, 0.0
      %78 = vst.msk [vmem:[#allocation3] sm:$0xff] %vm76, 0.0
    $region37: #{tpu_custom_call.1} parent=1 // pred_fallthru
      _
    %v79 = vld [vmem:[#allocation4] sm:$0xff]
    %v80 = vmul.f32 %v79, %v79
    %vm81 = vcmask 261120
    %v82 = vsel %vm81, %v80, 0.0
    %83 = vadd.xlane.f32.xlu0 %v82
    %v84 = vpop.xlane.xlu0 %83
    %v85 = vmax.f32 %v84, 1e-16
    %v86 = vrsqrt.pop %v85
    %v87 = vmul.f32 %v86, %v85
    %v88 = vmul.f32 %v87, %v86
    %v89 = vmul.f32 0.5, %v88
    %v90 = vsub.f32 1.5, %v89
    %v91 = vmul.f32 %v86, %v90
    %vm92 = vweird.f32 %v85
    %vm93 = vweird.f32 %v86
    %vm94 = vmor %vm92, %vm93
    %v95 = vsel %vm94, %v86, %v91
    %v96 = vmul.f32 %v79, %v95
    %v97 = vld [vmem:[#allocation6] sm:$0xff]
    %v98 = vmul.f32 %v97, %v97
    %v99 = vsel %vm81, %v98, 0.0
    %100 = vadd.xlane.f32.xlu0 %v99
    %v101 = vpop.xlane.xlu0 %100
    %v102 = vmax.f32 %v101, 1e-16
    %v103 = vrsqrt.pop %v102
    %v104 = vmul.f32 %v103, %v102
    %v105 = vmul.f32 %v104, %v103
    %v106 = vmul.f32 0.5, %v105
    %v107 = vsub.f32 1.5, %v106
    %v108 = vmul.f32 %v103, %v107
    %vm109 = vweird.f32 %v102
    %vm110 = vweird.f32 %v103
    %vm111 = vmor %vm109, %vm110
    %v112 = vsel %vm111, %v103, %v108
    %v113 = vmul.f32 %v97, %v112
    %v114 = vld [vmem:[#allocation8] sm:$0xff]
    %v115 = vmul.f32 %v114, %v114
    %v116 = vsel %vm81, %v115, 0.0
    %117 = vadd.xlane.f32.xlu0 %v116
    %v118 = vpop.xlane.xlu0 %117
    %v119 = vmax.f32 %v118, 1e-16
    %v120 = vrsqrt.pop %v119
    %v121 = vmul.f32 %v120, %v119
    %v122 = vmul.f32 %v121, %v120
    %v123 = vmul.f32 0.5, %v122
    %v124 = vsub.f32 1.5, %v123
    %v125 = vmul.f32 %v120, %v124
    %vm126 = vweird.f32 %v119
    %vm127 = vweird.f32 %v120
    %vm128 = vmor %vm126, %vm127
    %v129 = vsel %vm128, %v120, %v125
    %v130 = vmul.f32 %v114, %v129
    %v131 = vld [vmem:[#allocation9] sm:$0xff]
    %v132 = vmul.f32 %v131, %v131
    %v133 = vsel %vm81, %v132, 0.0
    %134 = vadd.xlane.f32.xlu0 %v133
    %v135 = vpop.xlane.xlu0 %134
    %v136 = vmax.f32 %v135, 1e-16
    %v137 = vrsqrt.pop %v136
    %v138 = vmul.f32 %v137, %v136
    %v139 = vmul.f32 %v138, %v137
    %v140 = vmul.f32 0.5, %v139
    %v141 = vsub.f32 1.5, %v140
    %v142 = vmul.f32 %v137, %v141
    %vm143 = vweird.f32 %v136
    %vm144 = vweird.f32 %v137
    %vm145 = vmor %vm143, %vm144
    %v146 = vsel %vm145, %v137, %v142
    %v147 = vmul.f32 %v131, %v146
    %v148 = vld [vmem:[#allocation2] sm:$0xff]
    %v150 = vsel %vm81, %v96, 0
    %v153 = vsel %vm81, %v130, 0
    %155 = vmatpush.xpose.msra.mxu0 0.0
    %156 = vmatpush.xpose.msra.mxu0 0.0
    %157 = vmatpush.xpose.msra.mxu0 0.0
    %158 = vmatpush.xpose.msra.mxu0 0.0
    %159 = vmatpush.xpose.msra.mxu0 0.0
    %160 = vmatpush.xpose.msra.mxu0 0.0
    %161 = vmatpush.xpose.msra.mxu0 0.0
    %162 = vmatpush.xpose.msra.mxu0 0.0
    %163 = vmatpush.xpose.msra.mxu0 0.0
    %164 = vmatpush.xpose.msra.mxu0 0.0
    %165 = vmatpush.xpose.msra.mxu0 0.0
    %166 = vmatpush.xpose.msra.mxu0 0.0
    %167 = vmatpush.xpose.msra.mxu0 0.0
    %168 = vmatpush.xpose.msra.mxu0 0.0
    %169 = vmatpush.xpose.msra.mxu0 0.0
    %170 = vmatpush.xpose.msra.mxu0 %v153
    %171 = vmatmul.f32.gmra.mxu0 %v150
    %v172 = vpop.f32.mrf.mxu0
    %v173 = vadd.f32 0.0, %v172
    %174 = vdwg.mxu0
    %v175 = vmul.f32 %v173, 5.0
    %v176 = vmul.f32 %v175, 1.442695
    %v177 = vpow.pop %v176
    %vm178 = vcmask 64512
    %v179 = vsel %vm178, %v177, 0.0
    %180 = vadd.xlane.f32.xlu0 %v179
    %v181 = vpop.xlane.xlu0 %180
    %v183 = vsel %vm81, %v147, 0
    %185 = vmatpush.xpose.msra.mxu0 0.0
    %186 = vmatpush.xpose.msra.mxu0 0.0
    %187 = vmatpush.xpose.msra.mxu0 0.0
    %188 = vmatpush.xpose.msra.mxu0 0.0
    %189 = vmatpush.xpose.msra.mxu0 0.0
    %190 = vmatpush.xpose.msra.mxu0 0.0
    %191 = vmatpush.xpose.msra.mxu0 0.0
    %192 = vmatpush.xpose.msra.mxu0 0.0
    %193 = vmatpush.xpose.msra.mxu0 0.0
    %194 = vmatpush.xpose.msra.mxu0 0.0
    %195 = vmatpush.xpose.msra.mxu0 0.0
    %196 = vmatpush.xpose.msra.mxu0 0.0
    %197 = vmatpush.xpose.msra.mxu0 0.0
    %198 = vmatpush.xpose.msra.mxu0 0.0
    %199 = vmatpush.xpose.msra.mxu0 0.0
    %200 = vmatpush.xpose.msra.mxu0 %v183
    %201 = vmatmul.f32.gmra.mxu0 %v150
    %v202 = vpop.f32.mrf.mxu0
    %v203 = vadd.f32 0.0, %v202
    %204 = vdwg.mxu0
    %v205 = vmul.f32 %v203, 5.0
    %v206 = vmul.f32 %v205, 1.442695
    %v207 = vpow.pop %v206
    %v208 = vsel %vm178, %v207, 0.0
    %209 = vadd.xlane.f32.xlu0 %v208
    %v210 = vpop.xlane.xlu0 %209
    %v211 = vadd.f32 %v181, %v210
    %v212 = vadd.f32 %v148, %v211
    %vm213 = vcmask 7168
    %214 = vst.msk [vmem:[#allocation2] sm:$0xff] %vm213, %v212
    %v215 = vld [vmem:[#allocation3] sm:$0xff]
    %v217 = vsel %vm81, %v113, 0
    %219 = vmatpush.xpose.msra.mxu0 0.0
    %220 = vmatpush.xpose.msra.mxu0 0.0
    %221 = vmatpush.xpose.msra.mxu0 0.0
    %222 = vmatpush.xpose.msra.mxu0 0.0
    %223 = vmatpush.xpose.msra.mxu0 0.0
    %224 = vmatpush.xpose.msra.mxu0 0.0
    %225 = vmatpush.xpose.msra.mxu0 0.0
    %226 = vmatpush.xpose.msra.mxu0 0.0
    %227 = vmatpush.xpose.msra.mxu0 0.0
    %228 = vmatpush.xpose.msra.mxu0 0.0
    %229 = vmatpush.xpose.msra.mxu0 0.0
    %230 = vmatpush.xpose.msra.mxu0 0.0
    %231 = vmatpush.xpose.msra.mxu0 0.0
    %232 = vmatpush.xpose.msra.mxu0 0.0
    %233 = vmatpush.xpose.msra.mxu0 0.0
    %234 = vmatpush.xpose.msra.mxu0 %v153
    %235 = vmatmul.f32.gmra.mxu0 %v217
    %v236 = vpop.f32.mrf.mxu0
    %v237 = vadd.f32 0.0, %v236
    %238 = vdwg.mxu0
    %v239 = vmul.f32 %v237, 5.0
    %v240 = vmul.f32 %v239, 1.442695
    %v241 = vpow.pop %v240
    %v242 = vsel %vm178, %v241, 0.0
    %243 = vadd.xlane.f32.xlu0 %v242
    %v244 = vpop.xlane.xlu0 %243
    %245 = vmatpush.xpose.msra.mxu0 0.0
    %246 = vmatpush.xpose.msra.mxu0 0.0
    %247 = vmatpush.xpose.msra.mxu0 0.0
    %248 = vmatpush.xpose.msra.mxu0 0.0
    %249 = vmatpush.xpose.msra.mxu0 0.0
    %250 = vmatpush.xpose.msra.mxu0 0.0
    %251 = vmatpush.xpose.msra.mxu0 0.0
    %252 = vmatpush.xpose.msra.mxu0 0.0
    %253 = vmatpush.xpose.msra.mxu0 0.0
    %254 = vmatpush.xpose.msra.mxu0 0.0
    %255 = vmatpush.xpose.msra.mxu0 0.0
    %256 = vmatpush.xpose.msra.mxu0 0.0
    %257 = vmatpush.xpose.msra.mxu0 0.0
    %258 = vmatpush.xpose.msra.mxu0 0.0
    %259 = vmatpush.xpose.msra.mxu0 0.0
    %260 = vmatpush.xpose.msra.mxu0 %v183
    %261 = vmatmul.f32.gmra.mxu0 %v217
    %v262 = vpop.f32.mrf.mxu0
    %v263 = vadd.f32 0.0, %v262
    %264 = vdwg.mxu0
    %v265 = vmul.f32 %v263, 5.0
    %v266 = vmul.f32 %v265, 1.442695
    %v267 = vpow.pop %v266
    %v268 = vsel %vm178, %v267, 0.0
    %269 = vadd.xlane.f32.xlu0 %v268
    %v270 = vpop.xlane.xlu0 %269
    %v271 = vadd.f32 %v244, %v270
    %v272 = vadd.f32 %v215, %v271
    %273 = vst.msk [vmem:[#allocation3] sm:$0xff] %vm213, %v272
    // Predicated region
    $region38: #{tpu_custom_call.1} parent=1 // pred_check
      %p274 = pneg %p72
    $region39: #{tpu_custom_call.1} parent=1 // pred_check_branch
      %276 = sbr.rel (%p274) target = $region41
    $region40: #{tpu_custom_call.1} parent=1 // pred_region
      %v277 = vmul.f32 %v96, %v113
      %v278 = vsel %vm81, %v277, 0.0
      %279 = vadd.xlane.f32.xlu0 %v278
      %v280 = vpop.xlane.xlu0 %279
      %v281 = vmul.f32 %v280, 5.0
      %v282 = vmul.f32 %v96, %v96
      %v283 = vsel %vm81, %v282, 0.0
      %284 = vadd.xlane.f32.xlu0 %v283
      %v285 = vpop.xlane.xlu0 %284
      %v286 = vmul.f32 %v285, 5.0
      %v287 = vmul.f32 %v286, 1.442695
      %v288 = vpow.pop %v287
      %v289 = vmul.f32 %v113, %v113
      %v290 = vsel %vm81, %v289, 0.0
      %291 = vadd.xlane.f32.xlu0 %v290
      %v292 = vpop.xlane.xlu0 %291
      %v293 = vmul.f32 %v292, 5.0
      %v294 = vmul.f32 %v293, 1.442695
      %v295 = vpow.pop %v294
      %v296 = vsub.f32 0.0, %v281
      %v297 = vld [vmem:[#allocation2] sm:$0xff]
      %v298 = vsub.f32 %v297, %v288
      %v299 = vlog2.pop %v298
      %v300 = vmul.f32 %v299, 0.6931472
      %v301 = vadd.f32 %v296, %v300
      %v302 = vld [vmem:[#allocation3] sm:$0xff]
      %v303 = vsub.f32 %v302, %v295
      %v304 = vlog2.pop %v303
      %v305 = vmul.f32 %v304, 0.6931472
      %v306 = vadd.f32 %v296, %v305
      %v307 = vadd.f32 %v301, %v306
      %308 = vst.msk [vmem:[%s4] sm:$0xff] %vm213, %v307
    $region41: #{tpu_custom_call.1} parent=1 // pred_fallthru
      _
    // Predicated region
    $region42: #{tpu_custom_call.1} parent=1 // pred_check
      _
    $region43: #{tpu_custom_call.1} parent=1 // pred_check_branch
      %310 = sbr.rel (0) target = $region45
    $region44: #{tpu_custom_call.1} parent=1 // pred_region
      _
    $region45: #{tpu_custom_call.1} parent=1 // pred_fallthru
      _
    // Predicated region
    $region46: #{tpu_custom_call.1} parent=1 // pred_check
      _
    $region47: #{tpu_custom_call.1} parent=1 // pred_check_branch
      %312 = sbr.rel (0) target = $region49
    $region48: #{tpu_custom_call.1} parent=1 // pred_region
      _
    $region49: #{tpu_custom_call.1} parent=1 // pred_fallthru
      _
    %313 = vsyncpa [#allocation5], 1
    %314 = vsyncpa [#allocation7], 1
    %315 = vsyncpa [#allocation10], 1

</llo_original>
